<compile_context>
chip_gen: v7x
topology: tpu7x:2x2x1
jax: 0.10.0
libtpu: 0.0.40
codegen_flags: <defaults>
</compile_context>

<pallas_src>
import functools
import math

import jax
import jax.numpy as jnp
from jax import lax
from jax.experimental import pallas as pl
from jax.experimental.pallas import tpu as pltpu

BN_EPS = 1e-5


def _round_up(a, b):
    return (a + b - 1) // b * b


def _vmem_limit(block_bytes):
    # Right-sized scoped VMEM (review #5): footprint + headroom, floored at the
    # 32 MiB default, capped well under v7x's 64 MiB per TensorCore.
    return int(min(96 * 2**20, max(32 * 2**20, block_bytes + (8 * 2**20))))


def _conv_activation(x_main, x_halo, w_ref, *, K, TL, stride, use_relu):
    """Conv1d on one row tile as K accumulating MXU matmuls (f32 accumulation).

    Kept as accumulating dots rather than patch assembly (review #6 / v5e note).
    """
    xw = jnp.concatenate([x_main, x_halo], axis=0)        # (TL*stride + H, Ci_p) bf16
    span = (TL - 1) * stride + 1
    acc = jnp.zeros((TL, w_ref.shape[-1]), jnp.float32)
    for k in range(K):                                    # K static & small -> unrolled
        xk = lax.slice_in_dim(xw, k, k + span, stride=stride, axis=0)  # (TL, Ci_p)
        acc = acc + jnp.dot(xk, w_ref[k], preferred_element_type=jnp.float32)
    if use_relu:
        acc = jnp.maximum(acc, 0.0)
    return acc


def _conv_stats_kernel(x_ref, xh_ref, w_ref, y_ref, sum_ref, sq_ref, *,
                       K, TL, stride, L_rem, use_relu):
    """Pass 1: conv + activation; store y once and accumulate per-N channel stats."""
    j = pl.program_id(1)

    @pl.when(j == 0)                                      # per-N accumulator init
    def _init():
        sum_ref[...] = jnp.zeros_like(sum_ref)
        sq_ref[...] = jnp.zeros_like(sq_ref)

    y = _conv_activation(x_ref[...], xh_ref[...], w_ref,
                         K=K, TL=TL, stride=stride, use_relu=use_relu)
    yb = y.astype(y_ref.dtype)
    y_ref[...] = yb                                       # y never recomputed (review #1)
    ys = yb.astype(jnp.float32)                           # stats over the values pass 2 sees

    if L_rem == 0:                                        # L_out % TL == 0: never any masking
        sum_ref[...] += jnp.sum(ys, axis=0, keepdims=True)
        sq_ref[...] += jnp.sum(ys * ys, axis=0, keepdims=True)
    else:                                                 # mask only on the ragged last tile
        is_last = j == pl.num_programs(1) - 1

        @pl.when(jnp.logical_not(is_last))
        def _full():
            sum_ref[...] += jnp.sum(ys, axis=0, keepdims=True)
            sq_ref[...] += jnp.sum(ys * ys, axis=0, keepdims=True)

        @pl.when(is_last)
        def _ragged():
            row = lax.broadcasted_iota(jnp.int32, (TL, 1), 0)
            ym = jnp.where(row < L_rem, ys, 0.0)
            sum_ref[...] += jnp.sum(ym, axis=0, keepdims=True)
            sq_ref[...] += jnp.sum(ym * ym, axis=0, keepdims=True)


def _bn_apply_kernel(y_ref, scale_ref, shift_ref, out_ref):
    """Pass 2: pure elementwise y*scale + shift with the NLC->NCL transpose folded in."""
    z = y_ref[...].astype(jnp.float32) * scale_ref[...] + shift_ref[...]   # (TL, Co_p)
    out_ref[...] = jnp.transpose(z).astype(out_ref.dtype)                  # (Co_p, TL)


def batchnorm_conv1d(x, weight, gamma, beta, *, stride, padding,
                     use_relu=True, row_tile=1024, y_dtype=jnp.bfloat16):
    """x: (N, C_in, L) f32; weight: (C_out, C_in, K); gamma/beta: (C_out,).
    Returns (N, C_out, L_out) = BatchNorm1d(activation(Conv1d(x))), batch statistics."""
    N, C_in, L = x.shape
    C_out, C_in_w, K = weight.shape
    assert C_in_w == C_in
    L_out = (L + 2 * padding - K) // stride + 1
    assert L_out >= 1

    # ---- tile geometry ----
    H = _round_up(max(K - stride, 1), 16)        # halo rows from the next tile (bf16-aligned)
    align_1 = H                                  # single-tile TL alignment (multiple of 16)
    align_m = math.lcm(H, 128)                   # multi-tile: transposed out block needs TL%128==0
    TL = _round_up(min(max(int(row_tile), align_1), L_out), align_1)
    if TL < L_out:
        TL = _round_up(TL, align_m)
    n_lt = -(-L_out // TL)
    if n_lt == 1:
        TL = _round_up(L_out, align_1)
    TLs = TL * stride                            # input rows stepped per tile (halo excluded)
    rem = L_out % TL                             # ragged rows in the last tile (0 -> none)
    halo_step = TLs // H                         # exact: H | TL  =>  H | TLs
    ci_p = _round_up(C_in, 128)                  # lane-dense operands
    co_p = _round_up(C_out, 128)

    # ---- layout glue: ONE fused transpose+pad+cast; no stacked / halo-duplicated copy ----
    L_total = max(n_lt * TLs + H, L + 2 * padding)
    x_cl = jnp.transpose(x, (0, 2, 1))           # (N, L, C_in)
    x_cl = jnp.pad(x_cl, ((0, 0), (padding, L_total - L - padding), (0, ci_p - C_in)))
    x_cl = x_cl.astype(jnp.bfloat16)             # read exactly once (pass 1 only)

    w = jnp.transpose(weight, (2, 1, 0))         # (K, C_in, C_out)
    w = jnp.pad(w, ((0, 0), (0, ci_p - C_in), (0, co_p - C_out))).astype(jnp.bfloat16)

    x_main_spec = pl.BlockSpec((None, TLs, ci_p), lambda n, j: (n, j, 0))
    x_halo_spec = pl.BlockSpec((None, H, ci_p), lambda n, j: (n, (j + 1) * halo_step, 0))
    w_spec = pl.BlockSpec((K, ci_p, co_p), lambda n, j: (0, 0, 0))   # resident weight

    y_bytes = jnp.dtype(y_dtype).itemsize
    o_bytes = jnp.dtype(x.dtype).itemsize
    p1_bytes = (2 * TLs * ci_p * 2 + 2 * H * ci_p * 2 + 2 * K * ci_p * co_p * 2
                + 2 * TL * co_p * y_bytes + 8 * co_p * 4
                + (TLs + H) * ci_p * 2 + 4 * TL * co_p * 4)
    p2_bytes = (2 * TL * co_p * y_bytes + 2 * co_p * TL * o_bytes
                + 4 * co_p * 4 + 3 * TL * co_p * 4)

    # ---- pass 1: conv + activation -> y (stored once) + per-N channel partial stats ----
    y, ysum, ysq = pl.pallas_call(
        functools.partial(_conv_stats_kernel, K=K, TL=TL, stride=stride,
                          L_rem=rem, use_relu=use_relu),
        out_shape=(jax.ShapeDtypeStruct((N, n_lt * TL, co_p), y_dtype),
                   jax.ShapeDtypeStruct((N, 1, co_p), jnp.float32),
                   jax.ShapeDtypeStruct((N, 1, co_p), jnp.float32)),
        grid=(N, n_lt),
        in_specs=[x_main_spec, x_halo_spec, w_spec],
        out_specs=[pl.BlockSpec((None, TL, co_p), lambda n, j: (n, j, 0)),
                   pl.BlockSpec((None, 1, co_p), lambda n, j: (n, 0, 0)),
                   pl.BlockSpec((None, 1, co_p), lambda n, j: (n, 0, 0))],
        compiler_params=pltpu.CompilerParams(
            dimension_semantics=("parallel", "arbitrary"),   # N shards across TCs on v7x
            vmem_limit_bytes=_vmem_limit(p1_bytes)),
    )(x_cl, x_cl, w)

    # ---- fold BN into per-channel scale/shift (training-mode batch statistics) ----
    # NOTE: var = E[y^2] - E[y]^2 in f32 is fine at these sizes; for very long
    # sequences / huge batches a shifted or two-pass variance would be safer.
    count = jnp.float32(N * L_out)               # pad rows are masked out of the sums
    mean = jnp.sum(ysum, axis=0) / count         # (1, co_p)
    var = jnp.maximum(jnp.sum(ysq, axis=0) / count - mean * mean, 0.0)
    gamma_p = jnp.pad(gamma.astype(jnp.float32), (0, co_p - C_out)).reshape(1, co_p)
    beta_p = jnp.pad(beta.astype(jnp.float32), (0, co_p - C_out)).reshape(1, co_p)
    scale = gamma_p * lax.rsqrt(var + BN_EPS)
    shift = beta_p - mean * scale

    # ---- pass 2: elementwise normalize of the stored y, channels-major output ----
    out_t = pl.pallas_call(
        _bn_apply_kernel,
        out_shape=jax.ShapeDtypeStruct((N, co_p, n_lt * TL), x.dtype),
        grid=(N, n_lt),
        in_specs=[pl.BlockSpec((None, TL, co_p), lambda n, j: (n, j, 0)),
                  pl.BlockSpec((1, co_p), lambda n, j: (0, 0)),
                  pl.BlockSpec((1, co_p), lambda n, j: (0, 0))],
        out_specs=pl.BlockSpec((None, co_p, TL), lambda n, j: (n, 0, j)),
        compiler_params=pltpu.CompilerParams(
            dimension_semantics=("parallel", "parallel"),
            vmem_limit_bytes=_vmem_limit(p2_bytes)),
    )(y, scale, shift)

    # TODO(synk): PyTorch training-mode BatchNorm1d also updates running_mean/var;
    # only the forward normalization with batch statistics is implemented here.
    return out_t[:, :C_out, :L_out]              # already (N, C_out, L_out); strip padding only


def _reference(x, weight, gamma, beta, *, stride, padding, use_relu, y_dtype=jnp.bfloat16):
    """Plain-JAX reference (conv + training-mode BN).  The conv+activation result is
    quantized to y_dtype, matching the kernel's inter-pass storage of y."""
    y = lax.conv_general_dilated(
        x, weight, window_strides=(stride,), padding=[(padding, padding)],
        dimension_numbers=("NCW", "OIW", "NCW"), precision=lax.Precision.HIGHEST)
    if use_relu:
        y = jnp.maximum(y, 0.0)
    y = y.astype(y_dtype).astype(jnp.float32)
    mean = jnp.mean(y, axis=(0, 2), keepdims=True)
    var = jnp.mean((y - mean) ** 2, axis=(0, 2), keepdims=True)
    xhat = (y - mean) * lax.rsqrt(var + BN_EPS)
    return gamma.reshape(1, -1, 1) * xhat + beta.reshape(1, -1, 1)


if __name__ == "__main__":
    # Small configs covering: single ragged tile, multi-tile ragged (halo crossing),
    # multi-tile exact with activation=None.
    configs = [
        dict(N=2, C_in=4, L=19,  C_out=8, K=3, stride=1, padding=1, use_relu=True,  row_tile=8),
        dict(N=2, C_in=4, L=300, C_out=8, K=5, stride=1, padding=2, use_relu=True,  row_tile=128),
        dict(N=2, C_in=4, L=256, C_out=8, K=3, stride=1, padding=1, use_relu=False, row_tile=128),
    ]
    key = jax.random.PRNGKey(0)
    for cfg in configs:
        key, kx, kw, kg, kb = jax.random.split(key, 5)
        N, C_in, L = cfg["N"], cfg["C_in"], cfg["L"]
        C_out, K, stride, padding = cfg["C_out"], cfg["K"], cfg["stride"], cfg["padding"]
        L_out = (L + 2 * padding - K) // stride + 1

        x = jax.random.normal(kx, (N, C_in, L), dtype=jnp.float32)
        weight = jax.random.normal(kw, (C_out, C_in, K), dtype=jnp.float32) / jnp.sqrt(C_in * K)
        gamma = 1.0 + 0.1 * jax.random.normal(kg, (C_out,), dtype=jnp.float32)
        beta = 0.1 * jax.random.normal(kb, (C_out,), dtype=jnp.float32)

        # The kernel feeds the MXU in bf16; quantize the conv inputs the same way so
        # the comparison isolates kernel correctness (not bf16 input rounding).
        xq = x.astype(jnp.bfloat16).astype(jnp.float32)
        wq = weight.astype(jnp.bfloat16).astype(jnp.float32)

        out = batchnorm_conv1d(xq, wq, gamma, beta, stride=stride, padding=padding,
                               use_relu=cfg["use_relu"], row_tile=cfg["row_tile"])
        out = jax.block_until_ready(out)

        ref = _reference(xq, wq, gamma, beta, stride=stride, padding=padding,
                         use_relu=cfg["use_relu"])
        assert out.shape == (N, C_out, L_out), (out.shape, (N, C_out, L_out))
        err = jnp.abs(out - ref)
        assert jnp.allclose(out, ref, atol=1e-2, rtol=1e-2), float(jnp.max(err))
        assert float(jnp.mean(err)) < 1e-3, float(jnp.mean(err))

    print("KERNEL_OK")
</pallas_src>

<mosaic_0001>
module attributes {stable_mosaic.version = 11 : i64} {
  func.func @_conv_stats_kernel(%arg0: i32, %arg1: i32, %arg2: memref<1x32x128xbf16, #tpu.memory_space<vmem>>, %arg3: memref<1x16x128xbf16, #tpu.memory_space<vmem>>, %arg4: memref<3x128x128xbf16, #tpu.memory_space<vmem>>, %arg5: memref<1x32x128xbf16, #tpu.memory_space<vmem>>, %arg6: memref<1x1x128xf32, #tpu.memory_space<vmem>>, %arg7: memref<1x1x128xf32, #tpu.memory_space<vmem>>) attributes {dimension_semantics = [#tpu.dimension_semantics<parallel>, #tpu.dimension_semantics<arbitrary>], iteration_bounds = array<i64: 2, 1>, scalar_prefetch = 0 : i64, scratch_operands = 0 : i64, tpu.core_type = #tpu.core_type<tc>, window_params = [{transform_indices = @transform_0, window_bounds = array<i64: 1, 32, 128>}, {transform_indices = @transform_1, window_bounds = array<i64: 1, 16, 128>}, {pipeline_mode = #tpu.pipeline_mode<synchronous>, transform_indices = @transform_2, window_bounds = array<i64: 3, 128, 128>}, {transform_indices = @transform_3, window_bounds = array<i64: 1, 32, 128>}, {transform_indices = @transform_4, window_bounds = array<i64: 1, 1, 128>}, {transform_indices = @transform_5, window_bounds = array<i64: 1, 1, 128>}]} {
    %c0_i32 = arith.constant 0 : i32
    %0 = arith.cmpi eq, %arg1, %c0_i32 : i32
    %1 = arith.extui %0 : i1 to i32
    %c0_i32_0 = arith.constant 0 : i32
    %2 = arith.cmpi ne, %1, %c0_i32_0 : i32
    scf.if %2 {
      %cst_23 = arith.constant 0.000000e+00 : f32
      %37 = vector.broadcast %cst_23 : f32 to vector<1x128xf32>
      %c0_24 = arith.constant 0 : index
      %c0_25 = arith.constant 0 : index
      %c0_26 = arith.constant 0 : index
      %38 = vector.load %arg6[%c0_24, %c0_25, %c0_26] : memref<1x1x128xf32, #tpu.memory_space<vmem>>, vector<1x1x128xf32>
      %39 = vector.shape_cast %38 : vector<1x1x128xf32> to vector<1x128xf32>
      %40 = vector.shape_cast %37 : vector<1x128xf32> to vector<1x1x128xf32>
      tpu.vector_store %arg6[%c0_24, %c0_25, %c0_26], %40 {strides = array<i32>} : memref<1x1x128xf32, #tpu.memory_space<vmem>>, vector<1x1x128xf32>,
      %cst_27 = arith.constant 0.000000e+00 : f32
      %41 = vector.broadcast %cst_27 : f32 to vector<1x128xf32>
      %c0_28 = arith.constant 0 : index
      %c0_29 = arith.constant 0 : index
      %c0_30 = arith.constant 0 : index
      %42 = vector.load %arg7[%c0_28, %c0_29, %c0_30] : memref<1x1x128xf32, #tpu.memory_space<vmem>>, vector<1x1x128xf32>
      %43 = vector.shape_cast %42 : vector<1x1x128xf32> to vector<1x128xf32>
      %44 = vector.shape_cast %41 : vector<1x128xf32> to vector<1x1x128xf32>
      tpu.vector_store %arg7[%c0_28, %c0_29, %c0_30], %44 {strides = array<i32>} : memref<1x1x128xf32, #tpu.memory_space<vmem>>, vector<1x1x128xf32>,
    } else {
    }
    %c0 = arith.constant 0 : index
    %c0_1 = arith.constant 0 : index
    %c0_2 = arith.constant 0 : index
    %3 = vector.load %arg2[%c0, %c0_1, %c0_2] : memref<1x32x128xbf16, #tpu.memory_space<vmem>>, vector<1x32x128xbf16>
    %4 = vector.shape_cast %3 : vector<1x32x128xbf16> to vector<32x128xbf16>
    %c0_3 = arith.constant 0 : index
    %c0_4 = arith.constant 0 : index
    %c0_5 = arith.constant 0 : index
    %5 = vector.load %arg3[%c0_3, %c0_4, %c0_5] : memref<1x16x128xbf16, #tpu.memory_space<vmem>>, vector<1x16x128xbf16>
    %6 = vector.shape_cast %5 : vector<1x16x128xbf16> to vector<16x128xbf16>
    %7 = tpu.concatenate %4, %6 in 0 : vector<32x128xbf16>, vector<16x128xbf16> -> vector<48x128xbf16>
    %cst = arith.constant 0.000000e+00 : f32
    %8 = vector.broadcast %cst : f32 to vector<32x128xf32>
    %9 = vector.extract_strided_slice %7 {offsets = [0, 0], sizes = [32, 128], strides = [1, 1]} : vector<48x128xbf16> to vector<32x128xbf16>
    %c0_6 = arith.constant 0 : index
    %c0_7 = arith.constant 0 : index
    %c0_8 = arith.constant 0 : index
    %10 = vector.load %arg4[%c0_6, %c0_7, %c0_8] : memref<3x128x128xbf16, #tpu.memory_space<vmem>>, vector<1x128x128xbf16>
    %11 = vector.shape_cast %10 : vector<1x128x128xbf16> to vector<128x128xbf16>
    %cst_9 = arith.constant dense<0.000000e+00> : vector<32x128xf32>
    %12 = tpu.matmul %9, %11, %cst_9 {dimension_numbers = #tpu.dot_dimension_numbers<[1], [0], [0], [1], [0, 0, 1, 1], [], []>} : vector<32x128xbf16>, vector<128x128xbf16>, vector<32x128xf32> -> vector<32x128xf32>
    %13 = arith.addf %8, %12 : vector<32x128xf32>
    %14 = vector.extract_strided_slice %7 {offsets = [1, 0], sizes = [32, 128], strides = [1, 1]} : vector<48x128xbf16> to vector<32x128xbf16>
    %c1 = arith.constant 1 : index
    %c0_10 = arith.constant 0 : index
    %c0_11 = arith.constant 0 : index
    %15 = vector.load %arg4[%c1, %c0_10, %c0_11] : memref<3x128x128xbf16, #tpu.memory_space<vmem>>, vector<1x128x128xbf16>
    %16 = vector.shape_cast %15 : vector<1x128x128xbf16> to vector<128x128xbf16>
    %cst_12 = arith.constant dense<0.000000e+00> : vector<32x128xf32>
    %17 = tpu.matmul %14, %16, %cst_12 {dimension_numbers = #tpu.dot_dimension_numbers<[1], [0], [0], [1], [0, 0, 1, 1], [], []>} : vector<32x128xbf16>, vector<128x128xbf16>, vector<32x128xf32> -> vector<32x128xf32>
    %18 = arith.addf %13, %17 : vector<32x128xf32>
    %19 = vector.extract_strided_slice %7 {offsets = [2, 0], sizes = [32, 128], strides = [1, 1]} : vector<48x128xbf16> to vector<32x128xbf16>
    %c2 = arith.constant 2 : index
    %c0_13 = arith.constant 0 : index
    %c0_14 = arith.constant 0 : index
    %20 = vector.load %arg4[%c2, %c0_13, %c0_14] : memref<3x128x128xbf16, #tpu.memory_space<vmem>>, vector<1x128x128xbf16>
    %21 = vector.shape_cast %20 : vector<1x128x128xbf16> to vector<128x128xbf16>
    %cst_15 = arith.constant dense<0.000000e+00> : vector<32x128xf32>
    %22 = tpu.matmul %19, %21, %cst_15 {dimension_numbers = #tpu.dot_dimension_numbers<[1], [0], [0], [1], [0, 0, 1, 1], [], []>} : vector<32x128xbf16>, vector<128x128xbf16>, vector<32x128xf32> -> vector<32x128xf32>
    %23 = arith.addf %18, %22 : vector<32x128xf32>
    %cst_16 = arith.constant 0.000000e+00 : f32
    %24 = vector.broadcast %cst_16 : f32 to vector<32x128xf32>
    %25 = arith.maximumf %23, %24 : vector<32x128xf32>
    %26 = arith.truncf %25 : vector<32x128xf32> to vector<32x128xbf16>
    %c0_17 = arith.constant 0 : index
    %c0_18 = arith.constant 0 : index
    %c0_19 = arith.constant 0 : index
    %27 = vector.load %arg5[%c0_17, %c0_18, %c0_19] : memref<1x32x128xbf16, #tpu.memory_space<vmem>>, vector<1x32x128xbf16>
    %28 = vector.shape_cast %27 : vector<1x32x128xbf16> to vector<32x128xbf16>
    %29 = vector.shape_cast %26 : vector<32x128xbf16> to vector<1x32x128xbf16>
    tpu.vector_store %arg5[%c0_17, %c0_18, %c0_19], %29 {strides = array<i32>} : memref<1x32x128xbf16, #tpu.memory_space<vmem>>, vector<1x32x128xbf16>,
    %30 = arith.extf %26 : vector<32x128xbf16> to vector<32x128xf32>
    %c0_i32_20 = arith.constant 0 : i32
    %31 = arith.cmpi eq, %arg1, %c0_i32_20 : i32
    %true = arith.constant true
    %32 = arith.xori %31, %true : i1
    %33 = arith.extui %32 : i1 to i32
    %c0_i32_21 = arith.constant 0 : i32
    %34 = arith.cmpi ne, %33, %c0_i32_21 : i32
    scf.if %34 {
      %c0_23 = arith.constant 0 : index
      %c0_24 = arith.constant 0 : index
      %c0_25 = arith.constant 0 : index
      %37 = vector.load %arg6[%c0_23, %c0_24, %c0_25] : memref<1x1x128xf32, #tpu.memory_space<vmem>>, vector<1x1x128xf32>
      %38 = vector.shape_cast %37 : vector<1x1x128xf32> to vector<1x128xf32>
      %cst_26 = arith.constant dense<0.000000e+00> : vector<128xf32>
      %39 = vector.multi_reduction <add>, %30, %cst_26 [0] : vector<32x128xf32> to vector<128xf32>
      %40 = vector.shape_cast %39 : vector<128xf32> to vector<1x128xf32>
      %41 = arith.addf %38, %40 : vector<1x128xf32>
      %c0_27 = arith.constant 0 : index
      %c0_28 = arith.constant 0 : index
      %c0_29 = arith.constant 0 : index
      %42 = vector.load %arg6[%c0_27, %c0_28, %c0_29] : memref<1x1x128xf32, #tpu.memory_space<vmem>>, vector<1x1x128xf32>
      %43 = vector.shape_cast %42 : vector<1x1x128xf32> to vector<1x128xf32>
      %44 = vector.shape_cast %41 : vector<1x128xf32> to vector<1x1x128xf32>
      tpu.vector_store %arg6[%c0_27, %c0_28, %c0_29], %44 {strides = array<i32>} : memref<1x1x128xf32, #tpu.memory_space<vmem>>, vector<1x1x128xf32>,
      %c0_30 = arith.constant 0 : index
      %c0_31 = arith.constant 0 : index
      %c0_32 = arith.constant 0 : index
      %45 = vector.load %arg7[%c0_30, %c0_31, %c0_32] : memref<1x1x128xf32, #tpu.memory_space<vmem>>, vector<1x1x128xf32>
      %46 = vector.shape_cast %45 : vector<1x1x128xf32> to vector<1x128xf32>
      %47 = arith.mulf %30, %30 : vector<32x128xf32>
      %cst_33 = arith.constant dense<0.000000e+00> : vector<128xf32>
      %48 = vector.multi_reduction <add>, %47, %cst_33 [0] : vector<32x128xf32> to vector<128xf32>
      %49 = vector.shape_cast %48 : vector<128xf32> to vector<1x128xf32>
      %50 = arith.addf %46, %49 : vector<1x128xf32>
      %c0_34 = arith.constant 0 : index
      %c0_35 = arith.constant 0 : index
      %c0_36 = arith.constant 0 : index
      %51 = vector.load %arg7[%c0_34, %c0_35, %c0_36] : memref<1x1x128xf32, #tpu.memory_space<vmem>>, vector<1x1x128xf32>
      %52 = vector.shape_cast %51 : vector<1x1x128xf32> to vector<1x128xf32>
      %53 = vector.shape_cast %50 : vector<1x128xf32> to vector<1x1x128xf32>
      tpu.vector_store %arg7[%c0_34, %c0_35, %c0_36], %53 {strides = array<i32>} : memref<1x1x128xf32, #tpu.memory_space<vmem>>, vector<1x1x128xf32>,
    } else {
    }
    %35 = arith.extui %31 : i1 to i32
    %c0_i32_22 = arith.constant 0 : i32
    %36 = arith.cmpi ne, %35, %c0_i32_22 : i32
    scf.if %36 {
      %37 = tpu.iota {dimensions = array<i32: 0>} : vector<32x1xi32>
      %c19_i32 = arith.constant 19 : i32
      %38 = vector.broadcast %c19_i32 : i32 to vector<32x1xi32>
      %39 = arith.cmpi slt, %37, %38 : vector<32x1xi32>
      %cst_23 = arith.constant 0.000000e+00 : f32
      %40 = vector.shape_cast %39 : vector<32x1xi1> to vector<32x1xi1>
      %41 = vector.broadcast %40 : vector<32x1xi1> to vector<32x128xi1>
      %42 = vector.broadcast %cst_23 : f32 to vector<32x128xf32>
      %43 = arith.select %41, %30, %42 : vector<32x128xi1>, vector<32x128xf32>
      %c0_24 = arith.constant 0 : index
      %c0_25 = arith.constant 0 : index
      %c0_26 = arith.constant 0 : index
      %44 = vector.load %arg6[%c0_24, %c0_25, %c0_26] : memref<1x1x128xf32, #tpu.memory_space<vmem>>, vector<1x1x128xf32>
      %45 = vector.shape_cast %44 : vector<1x1x128xf32> to vector<1x128xf32>
      %cst_27 = arith.constant dense<0.000000e+00> : vector<128xf32>
      %46 = vector.multi_reduction <add>, %43, %cst_27 [0] : vector<32x128xf32> to vector<128xf32>
      %47 = vector.shape_cast %46 : vector<128xf32> to vector<1x128xf32>
      %48 = arith.addf %45, %47 : vector<1x128xf32>
      %c0_28 = arith.constant 0 : index
      %c0_29 = arith.constant 0 : index
      %c0_30 = arith.constant 0 : index
      %49 = vector.load %arg6[%c0_28, %c0_29, %c0_30] : memref<1x1x128xf32, #tpu.memory_space<vmem>>, vector<1x1x128xf32>
      %50 = vector.shape_cast %49 : vector<1x1x128xf32> to vector<1x128xf32>
      %51 = vector.shape_cast %48 : vector<1x128xf32> to vector<1x1x128xf32>
      tpu.vector_store %arg6[%c0_28, %c0_29, %c0_30], %51 {strides = array<i32>} : memref<1x1x128xf32, #tpu.memory_space<vmem>>, vector<1x1x128xf32>,
      %c0_31 = arith.constant 0 : index
      %c0_32 = arith.constant 0 : index
      %c0_33 = arith.constant 0 : index
      %52 = vector.load %arg7[%c0_31, %c0_32, %c0_33] : memref<1x1x128xf32, #tpu.memory_space<vmem>>, vector<1x1x128xf32>
      %53 = vector.shape_cast %52 : vector<1x1x128xf32> to vector<1x128xf32>
      %54 = arith.mulf %43, %43 : vector<32x128xf32>
      %cst_34 = arith.constant dense<0.000000e+00> : vector<128xf32>
      %55 = vector.multi_reduction <add>, %54, %cst_34 [0] : vector<32x128xf32> to vector<128xf32>
      %56 = vector.shape_cast %55 : vector<128xf32> to vector<1x128xf32>
      %57 = arith.addf %53, %56 : vector<1x128xf32>
      %c0_35 = arith.constant 0 : index
      %c0_36 = arith.constant 0 : index
      %c0_37 = arith.constant 0 : index
      %58 = vector.load %arg7[%c0_35, %c0_36, %c0_37] : memref<1x1x128xf32, #tpu.memory_space<vmem>>, vector<1x1x128xf32>
      %59 = vector.shape_cast %58 : vector<1x1x128xf32> to vector<1x128xf32>
      %60 = vector.shape_cast %57 : vector<1x128xf32> to vector<1x1x128xf32>
      tpu.vector_store %arg7[%c0_35, %c0_36, %c0_37], %60 {strides = array<i32>} : memref<1x1x128xf32, #tpu.memory_space<vmem>>, vector<1x1x128xf32>,
    } else {
    }
    return
  }
  func.func @transform_0(%arg0: i32, %arg1: i32) -> (i32, i32, i32) {
    %c0_i32 = arith.constant 0 : i32
    %c0_i32_0 = arith.constant 0 : i32
    return %arg0, %arg1, %c0_i32 : i32, i32, i32
  }
  func.func @transform_1(%arg0: i32, %arg1: i32) -> (i32, i32, i32) {
    %c1_i32 = arith.constant 1 : i32
    %0 = arith.addi %arg1, %c1_i32 : i32
    %c2_i32 = arith.constant 2 : i32
    %1 = arith.muli %0, %c2_i32 : i32
    %c0_i32 = arith.constant 0 : i32
    %c0_i32_0 = arith.constant 0 : i32
    return %arg0, %1, %c0_i32 : i32, i32, i32
  }
  func.func @transform_2(%arg0: i32, %arg1: i32) -> (i32, i32, i32) {
    %c0_i32 = arith.constant 0 : i32
    %c0_i32_0 = arith.constant 0 : i32
    %c0_i32_1 = arith.constant 0 : i32
    %c0_i32_2 = arith.constant 0 : i32
    return %c0_i32, %c0_i32_0, %c0_i32_1 : i32, i32, i32
  }
  func.func @transform_3(%arg0: i32, %arg1: i32) -> (i32, i32, i32) {
    %c0_i32 = arith.constant 0 : i32
    %c0_i32_0 = arith.constant 0 : i32
    return %arg0, %arg1, %c0_i32 : i32, i32, i32
  }
  func.func @transform_4(%arg0: i32, %arg1: i32) -> (i32, i32, i32) {
    %c0_i32 = arith.constant 0 : i32
    %c0_i32_0 = arith.constant 0 : i32
    %c0_i32_1 = arith.constant 0 : i32
    return %arg0, %c0_i32, %c0_i32_0 : i32, i32, i32
  }
  func.func @transform_5(%arg0: i32, %arg1: i32) -> (i32, i32, i32) {
    %c0_i32 = arith.constant 0 : i32
    %c0_i32_0 = arith.constant 0 : i32
    %c0_i32_1 = arith.constant 0 : i32
    return %arg0, %c0_i32, %c0_i32_0 : i32, i32, i32
  }
}

</mosaic_0001>

<llo_original>
// kernel: tpu_custom_call.1
$region0: #{tpu_custom_call.1}
  #allocation0 [shape = 'u32[]', space=smem, size = 0x4, offset = 0x4, fixed_abs, tag = 'smem constant byte address 0x4 - core index']
  #allocation1 [shape = 'u32[144,128]{1,0:T(1,128)}', space=vmem, size = 0x12000, scoped, tag = 'internal scratch']
  %s0 = inlined_call_operand.hbm [shape: bf16[2,48,128], index: 0, kind: input, shape index: {}]
  %s1 = inlined_call_operand.hbm [shape: bf16[2,48,128], index: 1, kind: input, shape index: {}]
  %s2 = inlined_call_operand.hbm [shape: bf16[3,128,128], index: 2, kind: input, shape index: {}]
  %s3 = inlined_call_operand.hbm [shape: bf16[2,32,128], index: 3, kind: output, shape index: {0}]
  %s4 = inlined_call_operand.hbm [shape: f32[2,1,128], index: 4, kind: output, shape index: {1}]
  %s5 = inlined_call_operand.hbm [shape: f32[2,1,128], index: 5, kind: output, shape index: {2}]
  %6 = xla_tuple %s3, %s4, %s5
  %s7 = sld [smem:[#allocation0]]
  $region85: #{tpu_custom_call.1} parent=0
    _
  %s9 = ssub.s32 1, %s7
  %s10 = scalar_select 0, %s9, %s7
  $region1: #{tpu_custom_call.1} parent=0
    #allocation2 [shape = 'u8[16384]{0}', space=vmem, size = 0x4000, scoped, tag = 'input window, operand 0']
    #allocation3 [shape = 's32[2]{0}', space=sflag, size = 0x8, scoped, tag = 'scoped memory for tpu_custom_call.1']
    #allocation4 [shape = 's32[2]{0}', space=sflag, size = 0x8, scoped, tag = 'scoped memory for tpu_custom_call.1']
    #allocation5 [shape = 'u8[8192]{0}', space=vmem, size = 0x2000, scoped, tag = 'input window, operand 1']
    #allocation6 [shape = 's32[2]{0}', space=sflag, size = 0x8, scoped, tag = 'scoped memory for tpu_custom_call.1']
    #allocation7 [shape = 'u8[98304]{0}', space=vmem, size = 0x18000, scoped, tag = 'input window, operand 2, single buffered']
    #allocation8 [shape = 'u8[16384]{0}', space=vmem, size = 0x4000, scoped, tag = 'output window, operand 0']
    #allocation9 [shape = 'u8[1024]{0}', space=vmem, size = 0x400, scoped, tag = 'output window, operand 1']
    #allocation10 [shape = 's32[2]{0}', space=sflag, size = 0x8, scoped, tag = 'scoped memory for tpu_custom_call.1']
    #allocation11 [shape = 'u8[1024]{0}', space=vmem, size = 0x400, scoped, tag = 'output window, operand 2']
    %11 = vsyncpa [#allocation3], 0
    %s12 = scalar_lea.sflag [#allocation3], 1
    %13 = vsyncpa %s12, 0
    %14 = vsyncpa [#allocation6], 0
    %s15 = scalar_lea.sflag [#allocation6], 1
    %16 = vsyncpa %s15, 0
    %17 = vsyncpa [#allocation4], 0
    %s18 = scalar_lea.sflag [#allocation4], 1
    %19 = vsyncpa %s18, 0
    %20 = vsyncpa [#allocation10], 0
    %s21 = scalar_lea.sflag [#allocation10], 1
    %22 = vsyncpa %s21, 0
    loop: start=0, step=1, limit=4
    $region2: #{tpu_custom_call.1} parent=1 // loop_pre_header
      _
    $region3: #{tpu_custom_call.1} parent=1 // loop_header
      %s24 = sphi 0, %s28
      %p25 = scmp.ge.s32.totalorder %s24, 4
      %s31 = sphi 0, %s43
      %s32 = sphi 0, %s39
      %s33 = sphi 0, %s31
      %s34 = sphi 0, %s32
      %s35 = sphi 0, %s33
      %s36 = sphi 0, %s34
      %s48 = sphi 0, %s50
      %s51 = sphi 0, %s48
      %s52 = sphi 0, %s51
      %s68 = sphi 0, %s52
      %s80 = sphi 0, %s82
      %s83 = sphi 0, %s80
      %s84 = sphi 0, %s83
      %s100 = sphi 0, %s84
      %s104 = sphi 0, %s104
      %s106 = sphi 0, %s104
      %s107 = sphi 0, %s106
      %s121 = sphi 0, %s107
      %s129 = sphi 0, %s131
      %s132 = sphi 0, %s129
      %s133 = sphi 0, %s132
      %s149 = sphi 0, %s133
      %s155 = sphi 0, %s157
      %s158 = sphi 0, %s155
      %s159 = sphi 0, %s158
      %s175 = sphi 0, %s159
      %s181 = sphi 0, %s183
      %s184 = sphi 0, %s181
      %s185 = sphi 0, %s184
      %s201 = sphi 0, %s185
    $region4: #{tpu_custom_call.1} parent=1 // loop_header_branch
      %27 = sbr.rel (%p25) target = $region8
    $region5: #{tpu_custom_call.1} parent=1 // loop_body
      %s29 = ssub.s32 %s24, 1
      %s30 = ssub.s32 %s24, 2
      %s37 = sadd.s32 1, %s32
      %p38 = scmp.ge.s32.totalorder %s37, 1
      %s39 = scalar_select %p38, 0, %s37
      %s40 = sadd.s32 1, %s31
      %s41 = scalar_select %p38, %s40, %s31
      %p42 = scmp.ge.s32.totalorder %s41, 2
      %s43 = scalar_select %p42, 0, %s41
      %s44 = ssub.s32 %s31, %s43
      %s45 = ssub.s32 %s32, %s39
      %s46 = sor.u32 %s44, %s45
      %p47 = scmp.eq.s32.totalorder %s46, 0
      %s49 = sadd.s32 %s48, 1
      %s50 = scalar_select %p47, %s48, %s49
      %p53 = pneg %p47
      %p54 = scmp.eq.s32.totalorder %s24, 1
      %p55 = por %p53, %p54
      %p56 = scmp.ne.s32.totalorder %s48, %s51
      %p57 = scmp.eq.s32.totalorder %s24, 0
      %p58 = por %p56, %p57
      %p59 = scmp.ne.s32.totalorder %s48, %s51
      %p60 = scmp.eq.s32.totalorder %s29, 1
      %p61 = por %p59, %p60
      %p62 = scmp.ne.s32.totalorder %s51, %s52
      %p63 = scmp.eq.s32.totalorder %s29, 0
      %p64 = por %p62, %p63
      %p65 = scmp.ne.s32.totalorder %s51, %s52
      %p66 = scmp.eq.s32.totalorder %s30, 1
      %p67 = por %p65, %p66
      %p69 = scmp.ne.s32.totalorder %s52, %s68
      %p70 = scmp.eq.s32.totalorder %s30, 0
      %p71 = por %p69, %p70
      %s72 = sadd.s32 %s32, 1
      %s73 = smul.u32 %s72, 2
      %s74 = sadd.s32 %s39, 1
      %s75 = smul.u32 %s74, 2
      %s76 = ssub.s32 %s31, %s43
      %s77 = ssub.s32 %s73, %s75
      %s78 = sor.u32 %s76, %s77
      %p79 = scmp.eq.s32.totalorder %s78, 0
      %s81 = sadd.s32 %s80, 1
      %s82 = scalar_select %p79, %s80, %s81
      %p85 = pneg %p79
      %p86 = scmp.eq.s32.totalorder %s24, 1
      %p87 = por %p85, %p86
      %p88 = scmp.ne.s32.totalorder %s80, %s83
      %p89 = scmp.eq.s32.totalorder %s24, 0
      %p90 = por %p88, %p89
      %p91 = scmp.ne.s32.totalorder %s80, %s83
      %p92 = scmp.eq.s32.totalorder %s29, 1
      %p93 = por %p91, %p92
      %p94 = scmp.ne.s32.totalorder %s83, %s84
      %p95 = scmp.eq.s32.totalorder %s29, 0
      %p96 = por %p94, %p95
      %p97 = scmp.ne.s32.totalorder %s83, %s84
      %p98 = scmp.eq.s32.totalorder %s30, 1
      %p99 = por %p97, %p98
      %p101 = scmp.ne.s32.totalorder %s84, %s100
      %p102 = scmp.eq.s32.totalorder %s30, 0
      %p103 = por %p101, %p102
      %s105 = sadd.s32 %s104, 1
      %p108 = scmp.eq.s32.totalorder %s24, 1
      %p109 = scmp.ne.s32.totalorder %s104, %s106
      %p110 = scmp.eq.s32.totalorder %s24, 0
      %p111 = por %p109, %p110
      %p112 = scmp.ne.s32.totalorder %s104, %s106
      %p113 = scmp.eq.s32.totalorder %s29, 1
      %p114 = por %p112, %p113
      %p115 = scmp.ne.s32.totalorder %s106, %s107
      %p116 = scmp.eq.s32.totalorder %s29, 0
      %p117 = por %p115, %p116
      %p118 = scmp.ne.s32.totalorder %s106, %s107
      %p119 = scmp.eq.s32.totalorder %s30, 1
      %p120 = por %p118, %p119
      %p122 = scmp.ne.s32.totalorder %s107, %s121
      %p123 = scmp.eq.s32.totalorder %s30, 0
      %p124 = por %p122, %p123
      %s125 = ssub.s32 %s31, %s43
      %s126 = ssub.s32 %s32, %s39
      %s127 = sor.u32 %s125, %s126
      %p128 = scmp.eq.s32.totalorder %s127, 0
      %s130 = sadd.s32 %s129, 1
      %s131 = scalar_select %p128, %s129, %s130
      %p134 = pneg %p128
      %p135 = scmp.eq.s32.totalorder %s24, 1
      %p136 = por %p134, %p135
      %p137 = scmp.ne.s32.totalorder %s129, %s132
      %p138 = scmp.eq.s32.totalorder %s24, 0
      %p139 = por %p137, %p138
      %p140 = scmp.ne.s32.totalorder %s129, %s132
      %p141 = scmp.eq.s32.totalorder %s29, 1
      %p142 = por %p140, %p141
      %p143 = scmp.ne.s32.totalorder %s132, %s133
      %p144 = scmp.eq.s32.totalorder %s29, 0
      %p145 = por %p143, %p144
      %p146 = scmp.ne.s32.totalorder %s132, %s133
      %p147 = scmp.eq.s32.totalorder %s30, 1
      %p148 = por %p146, %p147
      %p150 = scmp.ne.s32.totalorder %s133, %s149
      %p151 = scmp.eq.s32.totalorder %s30, 0
      %p152 = por %p150, %p151
      %s153 = ssub.s32 %s31, %s43
      %p154 = scmp.eq.s32.totalorder %s153, 0
      %s156 = sadd.s32 %s155, 1
      %s157 = scalar_select %p154, %s155, %s156
      %p160 = pneg %p154
      %p161 = scmp.eq.s32.totalorder %s24, 1
      %p162 = por %p160, %p161
      %p163 = scmp.ne.s32.totalorder %s155, %s158
      %p164 = scmp.eq.s32.totalorder %s24, 0
      %p165 = por %p163, %p164
      %p166 = scmp.ne.s32.totalorder %s155, %s158
      %p167 = scmp.eq.s32.totalorder %s29, 1
      %p168 = por %p166, %p167
      %p169 = scmp.ne.s32.totalorder %s158, %s159
      %p170 = scmp.eq.s32.totalorder %s29, 0
      %p171 = por %p169, %p170
      %p172 = scmp.ne.s32.totalorder %s158, %s159
      %p173 = scmp.eq.s32.totalorder %s30, 1
      %p174 = por %p172, %p173
      %p176 = scmp.ne.s32.totalorder %s159, %s175
      %p177 = scmp.eq.s32.totalorder %s30, 0
      %p178 = por %p176, %p177
      %s179 = ssub.s32 %s31, %s43
      %p180 = scmp.eq.s32.totalorder %s179, 0
      %s182 = sadd.s32 %s181, 1
      %s183 = scalar_select %p180, %s181, %s182
      %p186 = pneg %p180
      %p187 = scmp.eq.s32.totalorder %s24, 1
      %p188 = por %p186, %p187
      %p189 = scmp.ne.s32.totalorder %s181, %s184
      %p190 = scmp.eq.s32.totalorder %s24, 0
      %p191 = por %p189, %p190
      %p192 = scmp.ne.s32.totalorder %s181, %s184
      %p193 = scmp.eq.s32.totalorder %s29, 1
      %p194 = por %p192, %p193
      %p195 = scmp.ne.s32.totalorder %s184, %s185
      %p196 = scmp.eq.s32.totalorder %s29, 0
      %p197 = por %p195, %p196
      %p198 = scmp.ne.s32.totalorder %s184, %s185
      %p199 = scmp.eq.s32.totalorder %s30, 1
      %p200 = por %p198, %p199
      %p202 = scmp.ne.s32.totalorder %s185, %s201
      %p203 = scmp.eq.s32.totalorder %s30, 0
      %p204 = por %p202, %p203
      %p205 = scmp.le.s32.totalorder 1, %s24
      %p206 = scmp.lt.s32.totalorder %s24, 3
      %p207 = pnand %p205, %p206
      %p208 = pneg %p207
      // Predicated region
      $region9: #{tpu_custom_call.1} parent=5 // pred_check
        _
      $region10: #{tpu_custom_call.1} parent=5 // pred_check_branch
        %210 = sbr.rel (%p207) target = $region12
      $region11: #{tpu_custom_call.1} parent=5 // pred_region
        %s211 = ssub.s32 %s24, 1
        // Predicated region
        $region13: #{tpu_custom_call.1} parent=11 // pred_check
          %p212 = pneg %p117
        $region14: #{tpu_custom_call.1} parent=11 // pred_check_branch
          %214 = sbr.rel (%p212) target = $region16
        $region15: #{tpu_custom_call.1} parent=11 // pred_region
          %s216 = ssub.s32 3072, 3072
          %217 = vsyncadd [#allocation6], %s216
          %s218 = sshll.u32 [#allocation7], 4
          %s219 = int_to_ptr.vmem [resolvable:$true] %s218
          %224 = dma.hbm_to_vmem [thread:$0]  %s2, 3072, %s219, [#allocation6], 64, 64, 4
        $region16: #{tpu_custom_call.1} parent=11 // pred_fallthru
          _
      $region12: #{tpu_custom_call.1} parent=5 // pred_fallthru
        _
      %p225 = scmp.lt.s32.totalorder %s24, 2
      // Predicated region
      $region17: #{tpu_custom_call.1} parent=5 // pred_check
        %p226 = pneg %p225
      $region18: #{tpu_custom_call.1} parent=5 // pred_check_branch
        %228 = sbr.rel (%p226) target = $region20
      $region19: #{tpu_custom_call.1} parent=5 // pred_region
        // Predicated region
        $region21: #{tpu_custom_call.1} parent=19 // pred_check
          %p229 = pneg %p58
        $region22: #{tpu_custom_call.1} parent=19 // pred_check_branch
          %231 = sbr.rel (%p229) target = $region24
        $region23: #{tpu_custom_call.1} parent=19 // pred_region
          %s232 = sand.u32 %s48, 1
          %s233 = scalar_lea.sflag [#allocation3], %s232
          %s234 = sand.u32 %s48, 1
          %s235 = smul.addr %s234, 16
          %s236 = scalar_lea.vmem [#allocation2], %s235
          %s237 = smul.u32 4, %s32
          %s238 = ssub.s32 6, %s237
          %p239 = scmp.lt.s32.totalorder %s238, 4
          %s240 = scalar_select %p239, %s238, 4
          %s241 = smul.u32 64, %s240
          %s243 = ssub.s32 256, %s241
          %244 = vsyncadd %s233, %s243
          %p245 = scmp.ne.s32.totalorder 0, %s241
          %s246 = smul.addr %s31, 6
          %s247 = sadd.s32 %s237, %s246
          %s248 = smul.addr %s247, 64
          %s249 = scalar_lea.hbm %s0, %s248
          %s250 = smul.u32 4, %s240
          %s251 = sshll.u32 %s236, 4
          %s252 = int_to_ptr.vmem [resolvable:$true] %s251
          %s253 = sshll.u32 %s250, 4
          %257 = dma.hbm_to_vmem [thread:$0]  (%p245), %s249, %s253, %s252, %s233, 64, 64, 4
        $region24: #{tpu_custom_call.1} parent=19 // pred_fallthru
          _
        // Predicated region
        $region25: #{tpu_custom_call.1} parent=19 // pred_check
          %p258 = pneg %p90
        $region26: #{tpu_custom_call.1} parent=19 // pred_check_branch
          %260 = sbr.rel (%p258) target = $region28
        $region27: #{tpu_custom_call.1} parent=19 // pred_region
          %s261 = sand.u32 %s24, 1
          %s262 = scalar_lea.sflag [#allocation6], %s261
          %s263 = sand.u32 %s80, 1
          %s264 = smul.addr %s263, 8
          %s265 = scalar_lea.vmem [#allocation5], %s264
          %s266 = sadd.s32 %s32, 1
          %s267 = smul.u32 %s266, 2
          %s268 = smul.u32 2, %s267
          %s270 = ssub.s32 128, 128
          %271 = vsyncadd %s262, %s270
          %s272 = smul.addr %s31, 6
          %s273 = sadd.s32 %s268, %s272
          %s274 = smul.addr %s273, 64
          %s275 = scalar_lea.hbm %s1, %s274
          %s276 = sshll.u32 %s265, 4
          %s277 = int_to_ptr.vmem [resolvable:$true] %s276
          %282 = dma.hbm_to_vmem [thread:$0]  %s275, 128, %s277, %s262, 64, 64, 4
        $region28: #{tpu_custom_call.1} parent=19 // pred_fallthru
          _
      $region20: #{tpu_custom_call.1} parent=5 // pred_fallthru
        _
      %p283 = scmp.le.s32.totalorder 1, %s24
      %p284 = scmp.lt.s32.totalorder %s24, 3
      %p285 = pnand %p283, %p284
      %p286 = pneg %p285
      // Predicated region
      $region29: #{tpu_custom_call.1} parent=5 // pred_check
        _
      $region30: #{tpu_custom_call.1} parent=5 // pred_check_branch
        %288 = sbr.rel (%p285) target = $region32
      $region31: #{tpu_custom_call.1} parent=5 // pred_region
        %s289 = ssub.s32 %s24, 1
        %s290 = sand.u32 %s51, 1
        %s291 = scalar_lea.sflag [#allocation3], %s290
        %s292 = sand.u32 %s51, 1
        %s293 = smul.addr %s292, 16
        %s294 = scalar_lea.vmem [#allocation2], %s293
        // Predicated region
        $region33: #{tpu_custom_call.1} parent=31 // pred_check
          %p295 = pneg %p64
        $region34: #{tpu_custom_call.1} parent=31 // pred_check_branch
          %297 = sbr.rel (%p295) target = $region36
        $region35: #{tpu_custom_call.1} parent=31 // pred_region
          %298 = dma.done %s291, 256
        $region36: #{tpu_custom_call.1} parent=31 // pred_fallthru
          _
        %s299 = sand.u32 %s29, 1
        %s300 = scalar_lea.sflag [#allocation6], %s299
        %s301 = sand.u32 %s83, 1
        %s302 = smul.addr %s301, 8
        %s303 = scalar_lea.vmem [#allocation5], %s302
        // Predicated region
        $region37: #{tpu_custom_call.1} parent=31 // pred_check
          %p304 = pneg %p96
        $region38: #{tpu_custom_call.1} parent=31 // pred_check_branch
          %306 = sbr.rel (%p304) target = $region40
        $region39: #{tpu_custom_call.1} parent=31 // pred_region
          %307 = dma.done %s300, 128
        $region40: #{tpu_custom_call.1} parent=31 // pred_fallthru
          _
        // Predicated region
        $region41: #{tpu_custom_call.1} parent=31 // pred_check
          %p308 = pneg %p117
        $region42: #{tpu_custom_call.1} parent=31 // pred_check_branch
          %310 = sbr.rel (%p308) target = $region44
        $region43: #{tpu_custom_call.1} parent=31 // pred_region
          %311 = dma.done [#allocation6], 3072
        $region44: #{tpu_custom_call.1} parent=31 // pred_fallthru
          _
        %s312 = sand.u32 %s51, 1
        %s313 = scalar_lea.sflag [#allocation3], %s312
        %s314 = sand.u32 %s51, 1
        %s315 = smul.addr %s314, 16
        %s316 = scalar_lea.vmem [#allocation2], %s315
        %p317 = pneg %p64
        %p318 = pneg %p61
        %s319 = sand.u32 %s29, 1
        %s320 = scalar_lea.sflag [#allocation6], %s319
        %s321 = sand.u32 %s83, 1
        %s322 = smul.addr %s321, 8
        %s323 = scalar_lea.vmem [#allocation5], %s322
        %p324 = pneg %p96
        %p325 = pneg %p93
        %p326 = pneg %p117
        %p327 = pneg %p114
        %p328 = pneg %p145
        %p329 = pneg %p142
        %s330 = sand.u32 %s132, 1
        %s331 = scalar_lea.sflag [#allocation4], %s330
        %s332 = sand.u32 %s132, 1
        %s333 = smul.addr %s332, 16
        %s334 = scalar_lea.vmem [#allocation8], %s333
        %p335 = pneg %p171
        %p336 = pneg %p168
        %s337 = sand.u32 %s29, 1
        %s338 = scalar_lea.sflag [#allocation10], %s337
        %s339 = sand.u32 %s158, 1
        %s340 = scalar_lea.vmem [#allocation9], %s339
        %p341 = pneg %p197
        %p342 = pneg %p194
        %s343 = sand.u32 %s29, 1
        %s344 = scalar_lea.sflag [#allocation10], %s343
        %s345 = sand.u32 %s184, 1
        %s346 = scalar_lea.vmem [#allocation11], %s345
        %s347 = smul.u32 4, %s34
        %s348 = ssub.s32 6, %s347
        %p349 = scmp.lt.s32.totalorder %s348, 4
        %s350 = scalar_select %p349, %s348, 4
        %s351 = smul.u32 64, %s350
        %s352 = sadd.s32 %s34, 1
        %s353 = smul.u32 %s352, 2
        %s354 = smul.u32 2, %s353
        %s355 = smul.u32 4, %s34
        %p357 = scmp.eq.s32.totalorder %s34, 0
        // Predicated region
        $region45: #{tpu_custom_call.1} parent=31 // pred_check
          %p358 = pneg %p357
        $region46: #{tpu_custom_call.1} parent=31 // pred_check_branch
          %360 = sbr.rel (%p358) target = $region48
        $region47: #{tpu_custom_call.1} parent=31 // pred_region
          %361 = vst [vmem:[%s340] sm:$0x1] 0.0
          %362 = vst [vmem:[%s346] sm:$0x1] 0.0
        $region48: #{tpu_custom_call.1} parent=31 // pred_fallthru
          _
        %v363 = vld [vmem:[%s294] sm:$0xf]
        %v364 = vld [vmem:[%s294 + $0x4] sm:$0xf]
        %v365 = vld [vmem:[%s294 + $0x8] sm:$0xf]
        %v366 = vld [vmem:[%s294 + $0xc] sm:$0xf]
        %v367 = vld [vmem:[%s303] sm:$0xf]
        %v368 = vld [vmem:[%s303 + $0x4] sm:$0xf]
        %v373 = vunpack.c.l.b16 %v363
        %v374 = vunpack.c.l.b16 %v364
        %v375 = vunpack.c.l.b16 %v365
        %v376 = vunpack.c.l.b16 %v366
        %v377 = vpack.c.b16 %v374, %v373
        %v378 = vpack.c.b16 %v376, %v375
        %v383 = vunpack.c.l.b16 %v367
        %v384 = vunpack.c.l.b16 %v368
        %v385 = vpack.c.b16 %v384, %v383
        %v386 = vld [vmem:[#allocation7] sm:$0xf]
        %v387 = vld [vmem:[#allocation7 + $0x4] sm:$0xf]
        %v388 = vld [vmem:[#allocation7 + $0x8] sm:$0xf]
        %v389 = vld [vmem:[#allocation7 + $0xc] sm:$0xf]
        %v390 = vld [vmem:[#allocation7 + $0x10] sm:$0xf]
        %v391 = vld [vmem:[#allocation7 + $0x14] sm:$0xf]
        %v392 = vld [vmem:[#allocation7 + $0x18] sm:$0xf]
        %v393 = vld [vmem:[#allocation7 + $0x1c] sm:$0xf]
        %v394 = vld [vmem:[#allocation7 + $0x20] sm:$0xf]
        %v395 = vld [vmem:[#allocation7 + $0x24] sm:$0xf]
        %v396 = vld [vmem:[#allocation7 + $0x28] sm:$0xf]
        %v397 = vld [vmem:[#allocation7 + $0x2c] sm:$0xf]
        %v398 = vld [vmem:[#allocation7 + $0x30] sm:$0xf]
        %v399 = vld [vmem:[#allocation7 + $0x34] sm:$0xf]
        %v400 = vld [vmem:[#allocation7 + $0x38] sm:$0xf]
        %v401 = vld [vmem:[#allocation7 + $0x3c] sm:$0xf]
        %s402 = scalar_lea.vmem [#allocation7], 64
        %v403 = vld [vmem:[%s402] sm:$0xf]
        %v404 = vld [vmem:[%s402 + $0x4] sm:$0xf]
        %v405 = vld [vmem:[%s402 + $0x8] sm:$0xf]
        %v406 = vld [vmem:[%s402 + $0xc] sm:$0xf]
        %v407 = vld [vmem:[%s402 + $0x10] sm:$0xf]
        %v408 = vld [vmem:[%s402 + $0x14] sm:$0xf]
        %v409 = vld [vmem:[%s402 + $0x18] sm:$0xf]
        %v410 = vld [vmem:[%s402 + $0x1c] sm:$0xf]
        %v411 = vld [vmem:[%s402 + $0x20] sm:$0xf]
        %v412 = vld [vmem:[%s402 + $0x24] sm:$0xf]
        %v413 = vld [vmem:[%s402 + $0x28] sm:$0xf]
        %v414 = vld [vmem:[%s402 + $0x2c] sm:$0xf]
        %v415 = vld [vmem:[%s402 + $0x30] sm:$0xf]
        %v416 = vld [vmem:[%s402 + $0x34] sm:$0xf]
        %v417 = vld [vmem:[%s402 + $0x38] sm:$0xf]
        %v418 = vld [vmem:[%s402 + $0x3c] sm:$0xf]
        %vm419 = vsmask.f32 7424
        %v421 = vshrl.u32 %v377, 16
        %v423 = vshll.u32 %v377, 16
        %v425 = vrot.slane %v423, 1
        %v426 = vor.u32 %v421, %v425
        %v428 = vshll.u32 %v378, 16
        %v430 = vrot.slane %v428, 1
        %v431 = vsel %vm419, %v426, %v430
        %v432 = vshrl.u32 %v378, 16
        %v434 = vor.u32 %v432, %v430
        %v436 = vshll.u32 %v385, 16
        %v438 = vrot.slane %v436, 1
        %v439 = vsel %vm419, %v434, %v438
        %v458 = vunpack.c.l.b16 %v403
        %v459 = vunpack.c.l.b16 %v404
        %v460 = vunpack.c.l.b16 %v405
        %v461 = vunpack.c.l.b16 %v406
        %v462 = vunpack.c.l.b16 %v407
        %v463 = vunpack.c.l.b16 %v408
        %v464 = vunpack.c.l.b16 %v409
        %v465 = vunpack.c.l.b16 %v410
        %v466 = vunpack.c.l.b16 %v411
        %v467 = vunpack.c.l.b16 %v412
        %v468 = vunpack.c.l.b16 %v413
        %v469 = vunpack.c.l.b16 %v414
        %v470 = vunpack.c.l.b16 %v415
        %v471 = vunpack.c.l.b16 %v416
        %v472 = vunpack.c.l.b16 %v417
        %v473 = vunpack.c.l.b16 %v418
        %v474 = vpack.c.b16 %v459, %v458
        %v475 = vpack.c.b16 %v461, %v460
        %v476 = vpack.c.b16 %v463, %v462
        %v477 = vpack.c.b16 %v465, %v464
        %v478 = vpack.c.b16 %v467, %v466
        %v479 = vpack.c.b16 %v469, %v468
        %v480 = vpack.c.b16 %v471, %v470
        %v481 = vpack.c.b16 %v473, %v472
        %490 = vmatprep.subr.bf16.mxu0 0
        %491 = vmatpush1.bf16.msra.mxu0 %v474
        %492 = vmatprep.subr.bf16.mxu0 0
        %493 = vmatpush1.bf16.msra.mxu0 %v475
        %494 = vmatprep.subr.bf16.mxu0 0
        %495 = vmatpush1.bf16.msra.mxu0 %v476
        %496 = vmatprep.subr.bf16.mxu0 0
        %497 = vmatpush1.bf16.msra.mxu0 %v477
        %498 = vmatprep.subr.bf16.mxu0 0
        %499 = vmatpush1.bf16.msra.mxu0 %v478
        %500 = vmatprep.subr.bf16.mxu0 0
        %501 = vmatpush1.bf16.msra.mxu0 %v479
        %502 = vmatprep.subr.bf16.mxu0 0
        %503 = vmatpush1.bf16.msra.mxu0 %v480
        %504 = vmatprep.subr.bf16.mxu0 0
        %505 = vmatpush1.bf16.msra.mxu0 %v481
        %506 = vmatprep.subr.bf16.mxu0 0
        %507 = vmatpush1.bf16.msra.mxu0 0
        %508 = vmatprep.subr.bf16.mxu0 0
        %509 = vmatpush1.bf16.msra.mxu0 0
        %510 = vmatprep.subr.bf16.mxu0 0
        %511 = vmatpush1.bf16.msra.mxu0 0
        %512 = vmatprep.subr.bf16.mxu0 0
        %513 = vmatpush1.bf16.msra.mxu0 0
        %514 = vmatprep.subr.bf16.mxu0 0
        %515 = vmatpush1.bf16.msra.mxu0 0
        %516 = vmatprep.subr.bf16.mxu0 0
        %517 = vmatpush1.bf16.msra.mxu0 0
        %518 = vmatprep.subr.bf16.mxu0 0
        %519 = vmatpush1.bf16.msra.mxu0 0
        %520 = vmatprep.subr.bf16.mxu0 0
        %521 = vmatpush1.bf16.msra.mxu0 0
        %522 = vmatprep.mubr.bf16.mxu0 0
        %523 = vmatmul.mubr.bf16.gmra.mrb[0].mxu0 %v431
        %v524 = vpop.f32.mrb[0].mxu0
        %v525 = vadd.f32 0.0, %v524
        %v526 = vpop.f32.mrb[0].mxu0
        %v527 = vpop.f32.mrb[0].mxu0
        %v528 = vadd.f32 0.0, %v527
        %v529 = vpop.f32.mrb[0].mxu0
        %530 = vmatprep.mubr.bf16.mxu0 0
        %531 = vmatmul.mubr.bf16.gmra.mrb[0].mxu0 %v439
        %v532 = vpop.f32.mrb[0].mxu0
        %v533 = vadd.f32 0.0, %v532
        %v534 = vpop.f32.mrb[0].mxu0
        %v535 = vpop.f32.mrb[0].mxu0
        %v536 = vadd.f32 0.0, %v535
        %v537 = vpop.f32.mrb[0].mxu0
        %538 = vdwg.mxu0
        %v555 = vunpack.c.l.b16 %v386
        %v556 = vunpack.c.l.b16 %v387
        %v557 = vunpack.c.l.b16 %v388
        %v558 = vunpack.c.l.b16 %v389
        %v559 = vunpack.c.l.b16 %v390
        %v560 = vunpack.c.l.b16 %v391
        %v561 = vunpack.c.l.b16 %v392
        %v562 = vunpack.c.l.b16 %v393
        %v563 = vunpack.c.l.b16 %v394
        %v564 = vunpack.c.l.b16 %v395
        %v565 = vunpack.c.l.b16 %v396
        %v566 = vunpack.c.l.b16 %v397
        %v567 = vunpack.c.l.b16 %v398
        %v568 = vunpack.c.l.b16 %v399
        %v569 = vunpack.c.l.b16 %v400
        %v570 = vunpack.c.l.b16 %v401
        %v571 = vpack.c.b16 %v556, %v555
        %v572 = vpack.c.b16 %v558, %v557
        %v573 = vpack.c.b16 %v560, %v559
        %v574 = vpack.c.b16 %v562, %v561
        %v575 = vpack.c.b16 %v564, %v563
        %v576 = vpack.c.b16 %v566, %v565
        %v577 = vpack.c.b16 %v568, %v567
        %v578 = vpack.c.b16 %v570, %v569
        %587 = vmatprep.subr.bf16.mxu0 0
        %588 = vmatpush1.bf16.msra.mxu0 %v571
        %589 = vmatprep.subr.bf16.mxu0 0
        %590 = vmatpush1.bf16.msra.mxu0 %v572
        %591 = vmatprep.subr.bf16.mxu0 0
        %592 = vmatpush1.bf16.msra.mxu0 %v573
        %593 = vmatprep.subr.bf16.mxu0 0
        %594 = vmatpush1.bf16.msra.mxu0 %v574
        %595 = vmatprep.subr.bf16.mxu0 0
        %596 = vmatpush1.bf16.msra.mxu0 %v575
        %597 = vmatprep.subr.bf16.mxu0 0
        %598 = vmatpush1.bf16.msra.mxu0 %v576
        %599 = vmatprep.subr.bf16.mxu0 0
        %600 = vmatpush1.bf16.msra.mxu0 %v577
        %601 = vmatprep.subr.bf16.mxu0 0
        %602 = vmatpush1.bf16.msra.mxu0 %v578
        %603 = vmatprep.subr.bf16.mxu0 0
        %604 = vmatpush1.bf16.msra.mxu0 0
        %605 = vmatprep.subr.bf16.mxu0 0
        %606 = vmatpush1.bf16.msra.mxu0 0
        %607 = vmatprep.subr.bf16.mxu0 0
        %608 = vmatpush1.bf16.msra.mxu0 0
        %609 = vmatprep.subr.bf16.mxu0 0
        %610 = vmatpush1.bf16.msra.mxu0 0
        %611 = vmatprep.subr.bf16.mxu0 0
        %612 = vmatpush1.bf16.msra.mxu0 0
        %613 = vmatprep.subr.bf16.mxu0 0
        %614 = vmatpush1.bf16.msra.mxu0 0
        %615 = vmatprep.subr.bf16.mxu0 0
        %616 = vmatpush1.bf16.msra.mxu0 0
        %617 = vmatprep.subr.bf16.mxu0 0
        %618 = vmatpush1.bf16.msra.mxu0 0
        %619 = vmatprep.mubr.bf16.mxu0 0
        %620 = vmatmul.mubr.bf16.gmra.mrb[0].mxu0 %v377
        %v621 = vpop.f32.mrb[0].mxu0
        %v622 = vadd.f32 %v525, %v621
        %v623 = vpop.f32.mrb[0].mxu0
        %v624 = vpop.f32.mrb[0].mxu0
        %v625 = vadd.f32 %v528, %v624
        %v626 = vpop.f32.mrb[0].mxu0
        %627 = vmatprep.mubr.bf16.mxu0 0
        %628 = vmatmul.mubr.bf16.gmra.mrb[0].mxu0 %v378
        %v629 = vpop.f32.mrb[0].mxu0
        %v630 = vadd.f32 %v533, %v629
        %v631 = vpop.f32.mrb[0].mxu0
        %v632 = vpop.f32.mrb[0].mxu0
        %v633 = vadd.f32 %v536, %v632
        %v634 = vpop.f32.mrb[0].mxu0
        %635 = vdwg.mxu0
        %s636 = scalar_lea.vmem [#allocation7], 128
        %v637 = vld [vmem:[%s636] sm:$0xf]
        %v638 = vld [vmem:[%s636 + $0x4] sm:$0xf]
        %v639 = vld [vmem:[%s636 + $0x8] sm:$0xf]
        %v640 = vld [vmem:[%s636 + $0xc] sm:$0xf]
        %v641 = vld [vmem:[%s636 + $0x10] sm:$0xf]
        %v642 = vld [vmem:[%s636 + $0x14] sm:$0xf]
        %v643 = vld [vmem:[%s636 + $0x18] sm:$0xf]
        %v644 = vld [vmem:[%s636 + $0x1c] sm:$0xf]
        %v645 = vld [vmem:[%s636 + $0x20] sm:$0xf]
        %v646 = vld [vmem:[%s636 + $0x24] sm:$0xf]
        %v647 = vld [vmem:[%s636 + $0x28] sm:$0xf]
        %v648 = vld [vmem:[%s636 + $0x2c] sm:$0xf]
        %v649 = vld [vmem:[%s636 + $0x30] sm:$0xf]
        %v650 = vld [vmem:[%s636 + $0x34] sm:$0xf]
        %v651 = vld [vmem:[%s636 + $0x38] sm:$0xf]
        %v652 = vld [vmem:[%s636 + $0x3c] sm:$0xf]
        %vm653 = vcmask 1046528
        %v654 = vrot.slane %v377, 1
        %v655 = vrot.slane %v378, 1
        %v656 = vsel %vm653, %v654, %v655
        %v657 = vrot.slane %v385, 1
        %v658 = vsel %vm653, %v655, %v657
        %v677 = vunpack.c.l.b16 %v637
        %v678 = vunpack.c.l.b16 %v638
        %v679 = vunpack.c.l.b16 %v639
        %v680 = vunpack.c.l.b16 %v640
        %v681 = vunpack.c.l.b16 %v641
        %v682 = vunpack.c.l.b16 %v642
        %v683 = vunpack.c.l.b16 %v643
        %v684 = vunpack.c.l.b16 %v644
        %v685 = vunpack.c.l.b16 %v645
        %v686 = vunpack.c.l.b16 %v646
        %v687 = vunpack.c.l.b16 %v647
        %v688 = vunpack.c.l.b16 %v648
        %v689 = vunpack.c.l.b16 %v649
        %v690 = vunpack.c.l.b16 %v650
        %v691 = vunpack.c.l.b16 %v651
        %v692 = vunpack.c.l.b16 %v652
        %v693 = vpack.c.b16 %v678, %v677
        %v694 = vpack.c.b16 %v680, %v679
        %v695 = vpack.c.b16 %v682, %v681
        %v696 = vpack.c.b16 %v684, %v683
        %v697 = vpack.c.b16 %v686, %v685
        %v698 = vpack.c.b16 %v688, %v687
        %v699 = vpack.c.b16 %v690, %v689
        %v700 = vpack.c.b16 %v692, %v691
        %709 = vmatprep.subr.bf16.mxu0 0
        %710 = vmatpush1.bf16.msra.mxu0 %v693
        %711 = vmatprep.subr.bf16.mxu0 0
        %712 = vmatpush1.bf16.msra.mxu0 %v694
        %713 = vmatprep.subr.bf16.mxu0 0
        %714 = vmatpush1.bf16.msra.mxu0 %v695
        %715 = vmatprep.subr.bf16.mxu0 0
        %716 = vmatpush1.bf16.msra.mxu0 %v696
        %717 = vmatprep.subr.bf16.mxu0 0
        %718 = vmatpush1.bf16.msra.mxu0 %v697
        %719 = vmatprep.subr.bf16.mxu0 0
        %720 = vmatpush1.bf16.msra.mxu0 %v698
        %721 = vmatprep.subr.bf16.mxu0 0
        %722 = vmatpush1.bf16.msra.mxu0 %v699
        %723 = vmatprep.subr.bf16.mxu0 0
        %724 = vmatpush1.bf16.msra.mxu0 %v700
        %725 = vmatprep.subr.bf16.mxu0 0
        %726 = vmatpush1.bf16.msra.mxu0 0
        %727 = vmatprep.subr.bf16.mxu0 0
        %728 = vmatpush1.bf16.msra.mxu0 0
        %729 = vmatprep.subr.bf16.mxu0 0
        %730 = vmatpush1.bf16.msra.mxu0 0
        %731 = vmatprep.subr.bf16.mxu0 0
        %732 = vmatpush1.bf16.msra.mxu0 0
        %733 = vmatprep.subr.bf16.mxu0 0
        %734 = vmatpush1.bf16.msra.mxu0 0
        %735 = vmatprep.subr.bf16.mxu0 0
        %736 = vmatpush1.bf16.msra.mxu0 0
        %737 = vmatprep.subr.bf16.mxu0 0
        %738 = vmatpush1.bf16.msra.mxu0 0
        %739 = vmatprep.subr.bf16.mxu0 0
        %740 = vmatpush1.bf16.msra.mxu0 0
        %741 = vmatprep.mubr.bf16.mxu0 0
        %742 = vmatmul.mubr.bf16.gmra.mrb[0].mxu0 %v656
        %v743 = vpop.f32.mrb[0].mxu0
        %v744 = vadd.f32 0.0, %v743
        %v745 = vpop.f32.mrb[0].mxu0
        %v746 = vpop.f32.mrb[0].mxu0
        %v747 = vadd.f32 0.0, %v746
        %v748 = vpop.f32.mrb[0].mxu0
        %749 = vmatprep.mubr.bf16.mxu0 0
        %750 = vmatmul.mubr.bf16.gmra.mrb[0].mxu0 %v658
        %v751 = vpop.f32.mrb[0].mxu0
        %v752 = vadd.f32 0.0, %v751
        %v753 = vpop.f32.mrb[0].mxu0
        %v754 = vpop.f32.mrb[0].mxu0
        %v755 = vadd.f32 0.0, %v754
        %v756 = vpop.f32.mrb[0].mxu0
        %757 = vdwg.mxu0
        %v758 = vadd.f32 %v622, %v744
        %v759 = vadd.f32 %v625, %v747
        %v760 = vadd.f32 %v630, %v752
        %v761 = vadd.f32 %v633, %v755
        %v762 = vmax.f32 %v758, 0.0
        %v763 = vmax.f32 %v759, 0.0
        %v764 = vmax.f32 %v760, 0.0
        %v765 = vmax.f32 %v761, 0.0
        %v766 = vpack.c.bf16 %v763, %v762
        %v767 = vpack.c.bf16 %v765, %v764
        %v770 = vunpack.c.l.b16 %v766
        %v771 = vunpack.c.h.b16 %v766
        %v772 = vunpack.c.l.b16 %v767
        %v773 = vunpack.c.h.b16 %v767
        %v774 = vpack.c.b16 %v770, %v770
        %v775 = vpack.c.b16 %v771, %v771
        %v776 = vpack.c.b16 %v772, %v772
        %v777 = vpack.c.b16 %v773, %v773
        %782 = vst [vmem:[%s334] sm:$0xf] %v774
        %783 = vst [vmem:[%s334 + $0x4] sm:$0xf] %v775
        %784 = vst [vmem:[%s334 + $0x8] sm:$0xf] %v776
        %785 = vst [vmem:[%s334 + $0xc] sm:$0xf] %v777
        %v786 = vunpack.c.l.bf16 %v766
        %v787 = vunpack.c.h.bf16 %v766
        %v788 = vunpack.c.l.bf16 %v767
        %v789 = vunpack.c.h.bf16 %v767
        %p790 = scmp.ne.s32.totalorder %s34, 0
        // Predicated region
        $region49: #{tpu_custom_call.1} parent=31 // pred_check
          %p791 = pneg %p790
        $region50: #{tpu_custom_call.1} parent=31 // pred_check_branch
          %793 = sbr.rel (%p791) target = $region52
        $region51: #{tpu_custom_call.1} parent=31 // pred_region
          %v794 = vld [vmem:[%s340] sm:$0x1]
          %v795 = vadd.f32 %v786, %v787
          %v796 = vadd.f32 %v795, %v788
          %v797 = vadd.f32 %v796, %v789
          %v798 = vrot.slane %v797, 4
          %v799 = vadd.f32 %v797, %v798
          %v800 = vrot.slane %v799, 2
          %v801 = vadd.f32 %v799, %v800
          %v802 = vrot.slane %v801, 1
          %v803 = vadd.f32 %v801, %v802
          %v804 = vadd.f32 %v794, %v803
          %805 = vst [vmem:[%s340] sm:$0x1] %v804
          %v806 = vld [vmem:[%s346] sm:$0x1]
          %v807 = vmul.f32 %v786, %v786
          %v808 = vmul.f32 %v787, %v787
          %v809 = vmul.f32 %v788, %v788
          %v810 = vmul.f32 %v789, %v789
          %v811 = vadd.f32 %v807, %v808
          %v812 = vadd.f32 %v811, %v809
          %v813 = vadd.f32 %v812, %v810
          %v814 = vrot.slane %v813, 4
          %v815 = vadd.f32 %v813, %v814
          %v816 = vrot.slane %v815, 2
          %v817 = vadd.f32 %v815, %v816
          %v818 = vrot.slane %v817, 1
          %v819 = vadd.f32 %v817, %v818
          %v820 = vadd.f32 %v806, %v819
          %821 = vst [vmem:[%s346] sm:$0x1] %v820
        $region52: #{tpu_custom_call.1} parent=31 // pred_fallthru
          _
        // Predicated region
        $region53: #{tpu_custom_call.1} parent=31 // pred_check
          %p822 = pneg %p357
        $region54: #{tpu_custom_call.1} parent=31 // pred_check_branch
          %824 = sbr.rel (%p822) target = $region56
        $region55: #{tpu_custom_call.1} parent=31 // pred_region
          %v825 = vlaneseq
          %v826 = vshrl.u32 %v825, 7
          %v827 = vadd.s32 %v826, 8
          %v828 = vadd.s32 %v826, 16
          %v829 = vadd.s32 %v826, 24
          %vm830 = vcmp.lt.s32.totalorder %v826, 19
          %vm831 = vcmp.lt.s32.totalorder %v827, 19
          %vm832 = vcmp.lt.s32.totalorder %v828, 19
          %vm833 = vcmp.lt.s32.totalorder %v829, 19
          %v834 = vsel %vm830, 1, 0
          %v835 = vsel %vm831, 1, 0
          %v836 = vsel %vm832, 1, 0
          %v837 = vsel %vm833, 1, 0
          %vm838 = vcmp.eq.s32.totalorder %v834, 1
          %vm839 = vcmp.eq.s32.totalorder %v835, 1
          %vm840 = vcmp.eq.s32.totalorder %v836, 1
          %vm841 = vcmp.eq.s32.totalorder %v837, 1
          %v842 = vsel %vm838, %v786, 0.0
          %v843 = vsel %vm839, %v787, 0.0
          %v844 = vsel %vm840, %v788, 0.0
          %v845 = vsel %vm841, %v789, 0.0
          %v846 = vld [vmem:[%s340] sm:$0x1]
          %v847 = vadd.f32 %v842, %v843
          %v848 = vadd.f32 %v847, %v844
          %v849 = vadd.f32 %v848, %v845
          %v850 = vrot.slane %v849, 4
          %v851 = vadd.f32 %v849, %v850
          %v852 = vrot.slane %v851, 2
          %v853 = vadd.f32 %v851, %v852
          %v854 = vrot.slane %v853, 1
          %v855 = vadd.f32 %v853, %v854
          %v856 = vadd.f32 %v846, %v855
          %857 = vst [vmem:[%s340] sm:$0x1] %v856
          %v858 = vld [vmem:[%s346] sm:$0x1]
          %v859 = vmul.f32 %v842, %v842
          %v860 = vmul.f32 %v843, %v843
          %v861 = vmul.f32 %v844, %v844
          %v862 = vmul.f32 %v845, %v845
          %v863 = vadd.f32 %v859, %v860
          %v864 = vadd.f32 %v863, %v861
          %v865 = vadd.f32 %v864, %v862
          %v866 = vrot.slane %v865, 4
          %v867 = vadd.f32 %v865, %v866
          %v868 = vrot.slane %v867, 2
          %v869 = vadd.f32 %v867, %v868
          %v870 = vrot.slane %v869, 1
          %v871 = vadd.f32 %v869, %v870
          %v872 = vadd.f32 %v858, %v871
          %873 = vst [vmem:[%s346] sm:$0x1] %v872
        $region56: #{tpu_custom_call.1} parent=31 // pred_fallthru
          _
        %s874 = sand.u32 %s132, 1
        %s875 = scalar_lea.sflag [#allocation4], %s874
        %s876 = sand.u32 %s132, 1
        %s877 = smul.addr %s876, 16
        %s878 = scalar_lea.vmem [#allocation8], %s877
        %s879 = sand.u32 %s29, 1
        %s880 = scalar_lea.sflag [#allocation10], %s879
        %s881 = sand.u32 %s158, 1
        %s882 = scalar_lea.vmem [#allocation9], %s881
        %s883 = sand.u32 %s29, 1
        %s884 = scalar_lea.sflag [#allocation10], %s883
        %s885 = sand.u32 %s184, 1
        %s886 = scalar_lea.vmem [#allocation11], %s885
        // Predicated region
        $region57: #{tpu_custom_call.1} parent=31 // pred_check
          %p887 = pneg %p142
        $region58: #{tpu_custom_call.1} parent=31 // pred_check_branch
          %889 = sbr.rel (%p887) target = $region60
        $region59: #{tpu_custom_call.1} parent=31 // pred_region
          %s890 = smul.u32 4, %s34
          %s892 = ssub.s32 256, 256
          %893 = vsyncadd %s875, %s892
          %s894 = smul.addr %s33, 4
          %s895 = sadd.s32 %s890, %s894
          %s896 = smul.addr %s895, 64
          %s897 = scalar_lea.hbm %s3, %s896
          %s898 = sshll.u32 %s878, 4
          %s899 = int_to_ptr.vmem [resolvable:$true] %s898
          %904 = dma.vmem_to_hbm [thread:$0]  %s899, 256, %s897, %s875, 64, 64, 4
        $region60: #{tpu_custom_call.1} parent=31 // pred_fallthru
          _
        // Predicated region
        $region61: #{tpu_custom_call.1} parent=31 // pred_check
          %p905 = pneg %p168
        $region62: #{tpu_custom_call.1} parent=31 // pred_check_branch
          %907 = sbr.rel (%p905) target = $region64
        $region63: #{tpu_custom_call.1} parent=31 // pred_region
          %s909 = ssub.s32 16, 16
          %910 = vsyncadd %s880, %s909
          %s911 = smul.addr %s33, 16
          %s912 = scalar_lea.hbm %s4, %s911
          %s914 = sshll.u32 %s882, 4
          %s915 = int_to_ptr.vmem [resolvable:$true] %s914
          %917 = dma.vmem_to_hbm [thread:$0]  %s915, 16, %s912, %s880
        $region64: #{tpu_custom_call.1} parent=31 // pred_fallthru
          _
        // Predicated region
        $region65: #{tpu_custom_call.1} parent=31 // pred_check
          %p918 = pneg %p194
        $region66: #{tpu_custom_call.1} parent=31 // pred_check_branch
          %920 = sbr.rel (%p918) target = $region68
        $region67: #{tpu_custom_call.1} parent=31 // pred_region
          %s922 = ssub.s32 16, 16
          %923 = vsyncadd %s884, %s922
          %s924 = smul.addr %s33, 16
          %s925 = scalar_lea.hbm %s5, %s924
          %s927 = sshll.u32 %s886, 4
          %s928 = int_to_ptr.vmem [resolvable:$true] %s927
          %930 = dma.vmem_to_hbm [thread:$0]  %s928, 16, %s925, %s884
        $region68: #{tpu_custom_call.1} parent=31 // pred_fallthru
          _
      $region32: #{tpu_custom_call.1} parent=5 // pred_fallthru
        _
      %p931 = scmp.le.s32.totalorder 2, %s24
      // Predicated region
      $region69: #{tpu_custom_call.1} parent=5 // pred_check
        %p932 = pneg %p931
      $region70: #{tpu_custom_call.1} parent=5 // pred_check_branch
        %934 = sbr.rel (%p932) target = $region72
      $region71: #{tpu_custom_call.1} parent=5 // pred_region
        %s935 = ssub.s32 %s24, 2
        // Predicated region
        $region73: #{tpu_custom_call.1} parent=71 // pred_check
          %p936 = pneg %p148
        $region74: #{tpu_custom_call.1} parent=71 // pred_check_branch
          %938 = sbr.rel (%p936) target = $region76
        $region75: #{tpu_custom_call.1} parent=71 // pred_region
          %s939 = sand.u32 %s133, 1
          %s940 = scalar_lea.sflag [#allocation4], %s939
          %s941 = sand.u32 %s133, 1
          %s942 = smul.addr %s941, 16
          %s943 = scalar_lea.vmem [#allocation8], %s942
          %944 = dma.done %s940, 256
        $region76: #{tpu_custom_call.1} parent=71 // pred_fallthru
          _
        // Predicated region
        $region77: #{tpu_custom_call.1} parent=71 // pred_check
          %p945 = pneg %p174
        $region78: #{tpu_custom_call.1} parent=71 // pred_check_branch
          %947 = sbr.rel (%p945) target = $region80
        $region79: #{tpu_custom_call.1} parent=71 // pred_region
          %s948 = sand.u32 %s30, 1
          %s949 = scalar_lea.sflag [#allocation10], %s948
          %s950 = sand.u32 %s159, 1
          %s951 = scalar_lea.vmem [#allocation9], %s950
          %952 = dma.done %s949, 16
        $region80: #{tpu_custom_call.1} parent=71 // pred_fallthru
          _
        // Predicated region
        $region81: #{tpu_custom_call.1} parent=71 // pred_check
          %p953 = pneg %p200
        $region82: #{tpu_custom_call.1} parent=71 // pred_check_branch
          %955 = sbr.rel (%p953) target = $region84
        $region83: #{tpu_custom_call.1} parent=71 // pred_region
          %s956 = sand.u32 %s30, 1
          %s957 = scalar_lea.sflag [#allocation10], %s956
          %s958 = sand.u32 %s185, 1
          %s959 = scalar_lea.vmem [#allocation11], %s958
          %960 = dma.done %s957, 16
        $region84: #{tpu_custom_call.1} parent=71 // pred_fallthru
          _
      $region72: #{tpu_custom_call.1} parent=5 // pred_fallthru
        _
    $region6: #{tpu_custom_call.1} parent=1 // loop_footer
      %s28 = sadd.s32 1, %s24
    $region7: #{tpu_custom_call.1} parent=1 // loop_footer_branch
      %23 = sbr.rel target = $region3
    $region8: #{tpu_custom_call.1} parent=1 // loop_exit
      _
    %961 = vsyncpa [#allocation3], 1
    %s962 = scalar_lea.sflag [#allocation3], 1
    %963 = vsyncpa %s962, 1
    %964 = vsyncpa [#allocation6], 1
    %s965 = scalar_lea.sflag [#allocation6], 1
    %966 = vsyncpa %s965, 1
    %967 = vsyncpa [#allocation4], 1
    %s968 = scalar_lea.sflag [#allocation4], 1
    %969 = vsyncpa %s968, 1
    %970 = vsyncpa [#allocation10], 1
    %s971 = scalar_lea.sflag [#allocation10], 1
    %972 = vsyncpa %s971, 1

</llo_original>
